<compile_context>
chip_gen: v5e
topology: v5e:2x2
jax: 0.10.0
libtpu: 0.0.40
codegen_flags: <defaults>
</compile_context>

<pallas_src>
import jax
import jax.numpy as jnp
from jax.experimental import pallas as pl
from jax.experimental.pallas import tpu as pltpu


K_IN = 50      # true input feature count
K_PAD = 128    # padded contraction dim for the first matmul
HID = 128      # hidden width
N_OUT = 10     # true number of classes
N_PAD = 128    # padded (lane-dense) output width


def mo_agent_kernel(x_ref, w1_ref, b1_ref, w2_ref, b2_ref, w3_ref, b3_ref, o_ref):
    # ---- L2-normalize over the feature axis (F.normalize, p=2, eps=1e-12) ----
    # Padded feature columns are zero, so sum-of-squares matches the 50-d input.
    x = x_ref[...]
    sumsq = jnp.sum(x * x, axis=-1, keepdims=True)
    xn = x * jax.lax.rsqrt(jnp.maximum(sumsq, 1e-24))   # == x / max(||x||, 1e-12)

    # ---- Linear(50->128) + Tanh (w1 rows 50..127 are zero-padded) ----
    h1 = jnp.tanh(
        jnp.dot(xn, w1_ref[...], preferred_element_type=jnp.float32) + b1_ref[...]
    )

    # ---- Linear(128->128) + Tanh ----
    h2 = jnp.tanh(
        jnp.dot(h1, w2_ref[...], preferred_element_type=jnp.float32) + b2_ref[...]
    )

    # ---- Linear(128->10 padded to 128) + Softmax ----
    # Padded columns carry bias -1e30 -> exp() == 0, so softmax over the 128
    # lanes equals softmax over the 10 real logits on those columns.
    logits = (
        jnp.dot(h2, w3_ref[...], preferred_element_type=jnp.float32) + b3_ref[...]
    )
    m = jnp.max(logits, axis=-1, keepdims=True)
    e = jnp.exp(logits - m)
    denom = jnp.sum(e, axis=-1, keepdims=True)
    o_ref[...] = e * pl.reciprocal(denom, approx=False)


def _round_up(n, m):
    return ((n + m - 1) // m) * m


def mo_agent_forward(x, w1, b1, w2, b2, w3, b3, *, tile_b=512):
    """x: (B, 50) f32; weights stored (in, out); biases (1, out)."""
    B = x.shape[0]

    # Tile size: multiple of 8 sublanes, no larger than the (padded) batch.
    tile_b = max(8, min(tile_b, _round_up(B, 8)))
    b_pad = _round_up(B, tile_b)

    # One-time wrapper padding (lane alignment + tail-tile safety).
    xp = jnp.zeros((b_pad, K_PAD), jnp.float32).at[:B, :K_IN].set(x)
    w1p = jnp.zeros((K_PAD, HID), jnp.float32).at[:K_IN, :].set(w1)
    w3p = jnp.zeros((HID, N_PAD), jnp.float32).at[:, :N_OUT].set(w3)
    b3p = jnp.full((1, N_PAD), -1e30, jnp.float32).at[:, :N_OUT].set(b3)

    grid = (b_pad // tile_b,)
    weight_spec_hh = pl.BlockSpec((HID, HID), lambda i: (0, 0))
    bias_spec = pl.BlockSpec((1, HID), lambda i: (0, 0))

    out = pl.pallas_call(
        mo_agent_kernel,
        out_shape=jax.ShapeDtypeStruct((b_pad, N_PAD), jnp.float32),
        grid=grid,
        in_specs=[
            pl.BlockSpec((tile_b, K_PAD), lambda i: (i, 0)),   # x tile
            pl.BlockSpec((K_PAD, HID), lambda i: (0, 0)),      # w1 (resident)
            bias_spec,                                         # b1
            weight_spec_hh,                                    # w2
            bias_spec,                                         # b2
            pl.BlockSpec((HID, N_PAD), lambda i: (0, 0)),      # w3 (padded)
            pl.BlockSpec((1, N_PAD), lambda i: (0, 0)),        # b3 (padded)
        ],
        out_specs=pl.BlockSpec((tile_b, N_PAD), lambda i: (i, 0)),
        compiler_params=pltpu.CompilerParams(
            dimension_semantics=("parallel",),
        ),
    )(xp, w1p, b1, w2, b2, w3p, b3p)

    return out[:B, :N_OUT]


def init_params(key):
    """Deterministic init mirroring nn.Linear shapes; weights stored (in, out)."""
    ks = jax.random.split(key, 6)

    def linear(kw, kb, fan_in, fan_out):
        bound = 1.0 / jnp.sqrt(fan_in)
        w = jax.random.uniform(kw, (fan_in, fan_out), jnp.float32, -bound, bound)
        b = jax.random.uniform(kb, (1, fan_out), jnp.float32, -bound, bound)
        return w, b

    w1, b1 = linear(ks[0], ks[1], K_IN, HID)
    w2, b2 = linear(ks[2], ks[3], HID, HID)
    w3, b3 = linear(ks[4], ks[5], HID, N_OUT)
    return w1, b1, w2, b2, w3, b3


def reference_forward(x, w1, b1, w2, b2, w3, b3):
    xn = x / jnp.maximum(jnp.linalg.norm(x, axis=-1, keepdims=True), 1e-12)
    h1 = jnp.tanh(xn @ w1 + b1)
    h2 = jnp.tanh(h1 @ w2 + b2)
    return jax.nn.softmax(h2 @ w3 + b3, axis=1)


if __name__ == "__main__":
    key = jax.random.PRNGKey(0)
    k_x, k_p = jax.random.split(key)

    B = 8
    x = jax.random.normal(k_x, (B, K_IN), dtype=jnp.float32)
    params = init_params(k_p)

    out = mo_agent_forward(x, *params)
    out = jax.block_until_ready(out)

    ref = reference_forward(x, *params)
    assert out.shape == (B, N_OUT)
    assert jnp.allclose(out, ref, atol=1e-5, rtol=1e-5)
    assert jnp.allclose(jnp.sum(out, axis=1), jnp.ones((B,)), atol=1e-5)

    print("KERNEL_OK")
</pallas_src>

<mosaic_0001>
module attributes {stable_mosaic.version = 11 : i64} {
  func.func @mo_agent_kernel(%arg0: i32, %arg1: memref<8x128xf32, #tpu.memory_space<vmem>>, %arg2: memref<128x128xf32, #tpu.memory_space<vmem>>, %arg3: memref<1x128xf32, #tpu.memory_space<vmem>>, %arg4: memref<128x128xf32, #tpu.memory_space<vmem>>, %arg5: memref<1x128xf32, #tpu.memory_space<vmem>>, %arg6: memref<128x128xf32, #tpu.memory_space<vmem>>, %arg7: memref<1x128xf32, #tpu.memory_space<vmem>>, %arg8: memref<8x128xf32, #tpu.memory_space<vmem>>) attributes {dimension_semantics = [#tpu.dimension_semantics<parallel>], iteration_bounds = array<i64: 1>, scalar_prefetch = 0 : i64, scratch_operands = 0 : i64, tpu.core_type = #tpu.core_type<tc>, window_params = [{transform_indices = @transform_0, window_bounds = array<i64: 8, 128>}, {pipeline_mode = #tpu.pipeline_mode<synchronous>, transform_indices = @transform_1, window_bounds = array<i64: 128, 128>}, {pipeline_mode = #tpu.pipeline_mode<synchronous>, transform_indices = @transform_2, window_bounds = array<i64: 1, 128>}, {pipeline_mode = #tpu.pipeline_mode<synchronous>, transform_indices = @transform_3, window_bounds = array<i64: 128, 128>}, {pipeline_mode = #tpu.pipeline_mode<synchronous>, transform_indices = @transform_4, window_bounds = array<i64: 1, 128>}, {pipeline_mode = #tpu.pipeline_mode<synchronous>, transform_indices = @transform_5, window_bounds = array<i64: 128, 128>}, {pipeline_mode = #tpu.pipeline_mode<synchronous>, transform_indices = @transform_6, window_bounds = array<i64: 1, 128>}, {transform_indices = @transform_7, window_bounds = array<i64: 8, 128>}]} {
    %c0 = arith.constant 0 : index
    %c0_0 = arith.constant 0 : index
    %0 = vector.load %arg1[%c0, %c0_0] : memref<8x128xf32, #tpu.memory_space<vmem>>, vector<8x128xf32>
    %1 = arith.mulf %0, %0 : vector<8x128xf32>
    %cst = arith.constant dense<0.000000e+00> : vector<8xf32>
    %2 = vector.multi_reduction <add>, %1, %cst [1] : vector<8x128xf32> to vector<8xf32>
    %3 = vector.shape_cast %2 : vector<8xf32> to vector<8x1xf32>
    %cst_1 = arith.constant 1.000000e-24 : f32
    %4 = vector.broadcast %cst_1 : f32 to vector<8x1xf32>
    %5 = arith.maximumf %3, %4 : vector<8x1xf32>
    %6 = math.rsqrt %5 : vector<8x1xf32>
    %7 = vector.broadcast %6 : vector<8x1xf32> to vector<8x128xf32>
    %8 = arith.mulf %0, %7 : vector<8x128xf32>
    %c0_2 = arith.constant 0 : index
    %c0_3 = arith.constant 0 : index
    %9 = vector.load %arg2[%c0_2, %c0_3] : memref<128x128xf32, #tpu.memory_space<vmem>>, vector<128x128xf32>
    %cst_4 = arith.constant dense<0.000000e+00> : vector<8x128xf32>
    %10 = tpu.matmul %8, %9, %cst_4 {dimension_numbers = #tpu.dot_dimension_numbers<[1], [0], [0], [1], [0, 0, 1, 1], [], []>} : vector<8x128xf32>, vector<128x128xf32>, vector<8x128xf32> -> vector<8x128xf32>
    %c0_5 = arith.constant 0 : index
    %c0_6 = arith.constant 0 : index
    %11 = vector.load %arg3[%c0_5, %c0_6] : memref<1x128xf32, #tpu.memory_space<vmem>>, vector<1x128xf32>
    %12 = vector.broadcast %11 : vector<1x128xf32> to vector<8x128xf32>
    %13 = arith.addf %10, %12 : vector<8x128xf32>
    %14 = math.tanh %13 : vector<8x128xf32>
    %c0_7 = arith.constant 0 : index
    %c0_8 = arith.constant 0 : index
    %15 = vector.load %arg4[%c0_7, %c0_8] : memref<128x128xf32, #tpu.memory_space<vmem>>, vector<128x128xf32>
    %cst_9 = arith.constant dense<0.000000e+00> : vector<8x128xf32>
    %16 = tpu.matmul %14, %15, %cst_9 {dimension_numbers = #tpu.dot_dimension_numbers<[1], [0], [0], [1], [0, 0, 1, 1], [], []>} : vector<8x128xf32>, vector<128x128xf32>, vector<8x128xf32> -> vector<8x128xf32>
    %c0_10 = arith.constant 0 : index
    %c0_11 = arith.constant 0 : index
    %17 = vector.load %arg5[%c0_10, %c0_11] : memref<1x128xf32, #tpu.memory_space<vmem>>, vector<1x128xf32>
    %18 = vector.broadcast %17 : vector<1x128xf32> to vector<8x128xf32>
    %19 = arith.addf %16, %18 : vector<8x128xf32>
    %20 = math.tanh %19 : vector<8x128xf32>
    %c0_12 = arith.constant 0 : index
    %c0_13 = arith.constant 0 : index
    %21 = vector.load %arg6[%c0_12, %c0_13] : memref<128x128xf32, #tpu.memory_space<vmem>>, vector<128x128xf32>
    %cst_14 = arith.constant dense<0.000000e+00> : vector<8x128xf32>
    %22 = tpu.matmul %20, %21, %cst_14 {dimension_numbers = #tpu.dot_dimension_numbers<[1], [0], [0], [1], [0, 0, 1, 1], [], []>} : vector<8x128xf32>, vector<128x128xf32>, vector<8x128xf32> -> vector<8x128xf32>
    %c0_15 = arith.constant 0 : index
    %c0_16 = arith.constant 0 : index
    %23 = vector.load %arg7[%c0_15, %c0_16] : memref<1x128xf32, #tpu.memory_space<vmem>>, vector<1x128xf32>
    %24 = vector.broadcast %23 : vector<1x128xf32> to vector<8x128xf32>
    %25 = arith.addf %22, %24 : vector<8x128xf32>
    %cst_17 = arith.constant dense<0xFF800000> : vector<8xf32>
    %26 = vector.multi_reduction <maximumf>, %25, %cst_17 [1] : vector<8x128xf32> to vector<8xf32>
    %27 = vector.shape_cast %26 : vector<8xf32> to vector<8x1xf32>
    %28 = vector.broadcast %27 : vector<8x1xf32> to vector<8x128xf32>
    %29 = arith.subf %25, %28 : vector<8x128xf32>
    %30 = math.exp %29 : vector<8x128xf32>
    %cst_18 = arith.constant dense<0.000000e+00> : vector<8xf32>
    %31 = vector.multi_reduction <add>, %30, %cst_18 [1] : vector<8x128xf32> to vector<8xf32>
    %32 = vector.shape_cast %31 : vector<8xf32> to vector<8x1xf32>
    %33 = tpu.reciprocal %32 : vector<8x1xf32> -> vector<8x1xf32>
    %34 = vector.broadcast %33 : vector<8x1xf32> to vector<8x128xf32>
    %35 = arith.mulf %30, %34 : vector<8x128xf32>
    %c0_19 = arith.constant 0 : index
    %c0_20 = arith.constant 0 : index
    %36 = vector.load %arg8[%c0_19, %c0_20] : memref<8x128xf32, #tpu.memory_space<vmem>>, vector<8x128xf32>
    tpu.vector_store %arg8[%c0_19, %c0_20], %35 {strides = array<i32>} : memref<8x128xf32, #tpu.memory_space<vmem>>, vector<8x128xf32>,
    return
  }
  func.func @transform_0(%arg0: i32) -> (i32, i32) {
    %c0_i32 = arith.constant 0 : i32
    %c0_i32_0 = arith.constant 0 : i32
    return %arg0, %c0_i32 : i32, i32
  }
  func.func @transform_1(%arg0: i32) -> (i32, i32) {
    %c0_i32 = arith.constant 0 : i32
    %c0_i32_0 = arith.constant 0 : i32
    %c0_i32_1 = arith.constant 0 : i32
    return %c0_i32, %c0_i32_0 : i32, i32
  }
  func.func @transform_2(%arg0: i32) -> (i32, i32) {
    %c0_i32 = arith.constant 0 : i32
    %c0_i32_0 = arith.constant 0 : i32
    %c0_i32_1 = arith.constant 0 : i32
    return %c0_i32, %c0_i32_0 : i32, i32
  }
  func.func @transform_3(%arg0: i32) -> (i32, i32) {
    %c0_i32 = arith.constant 0 : i32
    %c0_i32_0 = arith.constant 0 : i32
    %c0_i32_1 = arith.constant 0 : i32
    return %c0_i32, %c0_i32_0 : i32, i32
  }
  func.func @transform_4(%arg0: i32) -> (i32, i32) {
    %c0_i32 = arith.constant 0 : i32
    %c0_i32_0 = arith.constant 0 : i32
    %c0_i32_1 = arith.constant 0 : i32
    return %c0_i32, %c0_i32_0 : i32, i32
  }
  func.func @transform_5(%arg0: i32) -> (i32, i32) {
    %c0_i32 = arith.constant 0 : i32
    %c0_i32_0 = arith.constant 0 : i32
    %c0_i32_1 = arith.constant 0 : i32
    return %c0_i32, %c0_i32_0 : i32, i32
  }
  func.func @transform_6(%arg0: i32) -> (i32, i32) {
    %c0_i32 = arith.constant 0 : i32
    %c0_i32_0 = arith.constant 0 : i32
    %c0_i32_1 = arith.constant 0 : i32
    return %c0_i32, %c0_i32_0 : i32, i32
  }
  func.func @transform_7(%arg0: i32) -> (i32, i32) {
    %c0_i32 = arith.constant 0 : i32
    %c0_i32_0 = arith.constant 0 : i32
    return %arg0, %c0_i32 : i32, i32
  }
}

</mosaic_0001>

<llo_original>
// kernel: tpu_custom_call.1
$region0: #{tpu_custom_call.1}
  #allocation0 [shape = 'u32[]', space=smem, size = 0x4, offset = 0x4, fixed_abs, tag = 'smem constant byte address 0x4 - core index']
  #allocation1 [shape = 'u32[72,128]{1,0:T(1,128)}', space=vmem, size = 0x9000, scoped, tag = 'internal scratch']
  %s0 = inlined_call_operand.hbm [shape: f32[8,128], index: 0, kind: input, shape index: {}]
  %s1 = inlined_call_operand.hbm [shape: f32[128,128], index: 1, kind: input, shape index: {}]
  %s2 = inlined_call_operand.vmem [shape: f32[1,128], index: 2, kind: input, shape index: {}]
  %s3 = inlined_call_operand.hbm [shape: f32[128,128], index: 3, kind: input, shape index: {}]
  %s4 = inlined_call_operand.vmem [shape: f32[1,128], index: 4, kind: input, shape index: {}]
  %s5 = inlined_call_operand.hbm [shape: f32[128,128], index: 5, kind: input, shape index: {}]
  %s6 = inlined_call_operand.vmem [shape: f32[1,128], index: 6, kind: input, shape index: {}]
  %s7 = inlined_call_operand.hbm [shape: f32[8,128], index: 7, kind: output, shape index: {}]
  %s8 = sld [smem:[#allocation0]]
  $region54: #{tpu_custom_call.1} parent=0
    _
  %s10 = ssub.s32 1, %s8
  %s11 = scalar_select 0, %s10, %s8
  $region1: #{tpu_custom_call.1} parent=0
    #allocation2 [shape = 'u8[4096]{0}', space=vmem, size = 0x1000, scoped, tag = 'input window, operand 0, single buffered']
    #allocation3 [shape = 's32[1]{0}', space=sflag, size = 0x4, scoped, tag = 'scoped memory for tpu_custom_call.1']
    #allocation4 [shape = 's32[1]{0}', space=sflag, size = 0x4, scoped, tag = 'scoped memory for tpu_custom_call.1']
    #allocation5 [shape = 'u8[65536]{0}', space=vmem, size = 0x10000, scoped, tag = 'input window, operand 1, single buffered']
    #allocation6 [shape = 's32[1]{0}', space=sflag, size = 0x4, scoped, tag = 'scoped memory for tpu_custom_call.1']
    #allocation7 [shape = 'u8[65536]{0}', space=vmem, size = 0x10000, scoped, tag = 'input window, operand 3, single buffered']
    #allocation8 [shape = 'u8[65536]{0}', space=vmem, size = 0x10000, scoped, tag = 'input window, operand 5, single buffered']
    #allocation9 [shape = 's32[1]{0}', space=sflag, size = 0x4, scoped, tag = 'scoped memory for tpu_custom_call.1']
    #allocation10 [shape = 'u8[4096]{0}', space=vmem, size = 0x1000, scoped, tag = 'output window, operand 0, single buffered']
    %12 = vsyncpa [#allocation3], 0
    %13 = vsyncpa [#allocation6], 0
    %14 = vsyncpa [#allocation9], 0
    %15 = vsyncpa [#allocation4], 0
    // Predicated region
    $region2: #{tpu_custom_call.1} parent=1 // pred_check
      _
    $region3: #{tpu_custom_call.1} parent=1 // pred_check_branch
      %17 = sbr.rel (0) target = $region5
    $region4: #{tpu_custom_call.1} parent=1 // pred_region
      %19 = vsyncadd [#allocation3], 0
      %s21 = sshll.u32 %s0, 4
      %s22 = int_to_ptr.hbm [resolvable:$true] %s21
      %s23 = sshll.u32 [#allocation2], 4
      %s24 = int_to_ptr.vmem [resolvable:$true] %s23
      %26 = dma.hbm_to_vmem [thread:$0]  %s22, 128, %s24, [#allocation3]
    $region5: #{tpu_custom_call.1} parent=1 // pred_fallthru
      _
    // Predicated region
    $region6: #{tpu_custom_call.1} parent=1 // pred_check
      _
    $region7: #{tpu_custom_call.1} parent=1 // pred_check_branch
      %28 = sbr.rel (0) target = $region9
    $region8: #{tpu_custom_call.1} parent=1 // pred_region
      %30 = vsyncadd [#allocation6], 0
      %s31 = sshll.u32 %s1, 4
      %s32 = int_to_ptr.hbm [resolvable:$true] %s31
      %s33 = sshll.u32 [#allocation5], 4
      %s34 = int_to_ptr.vmem [resolvable:$true] %s33
      %39 = dma.hbm_to_vmem [thread:$0]  %s32, 2048, %s34, [#allocation6], 128, 128, 8
    $region9: #{tpu_custom_call.1} parent=1 // pred_fallthru
      _
    // Predicated region
    $region10: #{tpu_custom_call.1} parent=1 // pred_check
      _
    $region11: #{tpu_custom_call.1} parent=1 // pred_check_branch
      %41 = sbr.rel (0) target = $region13
    $region12: #{tpu_custom_call.1} parent=1 // pred_region
      _
    $region13: #{tpu_custom_call.1} parent=1 // pred_fallthru
      _
    // Predicated region
    $region14: #{tpu_custom_call.1} parent=1 // pred_check
      _
    $region15: #{tpu_custom_call.1} parent=1 // pred_check_branch
      %43 = sbr.rel (0) target = $region17
    $region16: #{tpu_custom_call.1} parent=1 // pred_region
      %45 = vsyncadd [#allocation6], 0
      %s46 = sshll.u32 %s3, 4
      %s47 = int_to_ptr.hbm [resolvable:$true] %s46
      %s48 = sshll.u32 [#allocation7], 4
      %s49 = int_to_ptr.vmem [resolvable:$true] %s48
      %54 = dma.hbm_to_vmem [thread:$0]  %s47, 2048, %s49, [#allocation6], 128, 128, 8
    $region17: #{tpu_custom_call.1} parent=1 // pred_fallthru
      _
    // Predicated region
    $region18: #{tpu_custom_call.1} parent=1 // pred_check
      _
    $region19: #{tpu_custom_call.1} parent=1 // pred_check_branch
      %56 = sbr.rel (0) target = $region21
    $region20: #{tpu_custom_call.1} parent=1 // pred_region
      _
    $region21: #{tpu_custom_call.1} parent=1 // pred_fallthru
      _
    // Predicated region
    $region22: #{tpu_custom_call.1} parent=1 // pred_check
      _
    $region23: #{tpu_custom_call.1} parent=1 // pred_check_branch
      %58 = sbr.rel (0) target = $region25
    $region24: #{tpu_custom_call.1} parent=1 // pred_region
      %60 = vsyncadd [#allocation9], 0
      %s61 = sshll.u32 %s5, 4
      %s62 = int_to_ptr.hbm [resolvable:$true] %s61
      %s63 = sshll.u32 [#allocation8], 4
      %s64 = int_to_ptr.vmem [resolvable:$true] %s63
      %69 = dma.hbm_to_vmem [thread:$0]  %s62, 2048, %s64, [#allocation9], 128, 128, 8
    $region25: #{tpu_custom_call.1} parent=1 // pred_fallthru
      _
    // Predicated region
    $region26: #{tpu_custom_call.1} parent=1 // pred_check
      _
    $region27: #{tpu_custom_call.1} parent=1 // pred_check_branch
      %71 = sbr.rel (0) target = $region29
    $region28: #{tpu_custom_call.1} parent=1 // pred_region
      _
    $region29: #{tpu_custom_call.1} parent=1 // pred_fallthru
      _
    // Predicated region
    $region30: #{tpu_custom_call.1} parent=1 // pred_check
      _
    $region31: #{tpu_custom_call.1} parent=1 // pred_check_branch
      %73 = sbr.rel (0) target = $region33
    $region32: #{tpu_custom_call.1} parent=1 // pred_region
      %75 = dma.done [#allocation3], 128
    $region33: #{tpu_custom_call.1} parent=1 // pred_fallthru
      _
    // Predicated region
    $region34: #{tpu_custom_call.1} parent=1 // pred_check
      _
    $region35: #{tpu_custom_call.1} parent=1 // pred_check_branch
      %77 = sbr.rel (0) target = $region37
    $region36: #{tpu_custom_call.1} parent=1 // pred_region
      %79 = dma.done [#allocation6], 2048
    $region37: #{tpu_custom_call.1} parent=1 // pred_fallthru
      _
    // Predicated region
    $region38: #{tpu_custom_call.1} parent=1 // pred_check
      _
    $region39: #{tpu_custom_call.1} parent=1 // pred_check_branch
      %81 = sbr.rel (0) target = $region41
    $region40: #{tpu_custom_call.1} parent=1 // pred_region
      %83 = dma.done [#allocation6], 2048
    $region41: #{tpu_custom_call.1} parent=1 // pred_fallthru
      _
    // Predicated region
    $region42: #{tpu_custom_call.1} parent=1 // pred_check
      _
    $region43: #{tpu_custom_call.1} parent=1 // pred_check_branch
      %85 = sbr.rel (0) target = $region45
    $region44: #{tpu_custom_call.1} parent=1 // pred_region
      %87 = dma.done [#allocation9], 2048
    $region45: #{tpu_custom_call.1} parent=1 // pred_fallthru
      _
    %v88 = vld [vmem:[#allocation2] sm:$0xff]
    %v89 = vmul.f32 %v88, %v88
    %90 = vadd.xlane.f32.xlu0 %v89
    %v91 = vpop.xlane.xlu0 %90
    %v92 = vmax.f32 %v91, 1e-24
    %v93 = vrsqrt.pop %v92
    %v94 = vmul.f32 %v93, %v92
    %v95 = vmul.f32 %v94, %v93
    %v96 = vmul.f32 0.5, %v95
    %v97 = vsub.f32 1.5, %v96
    %v98 = vmul.f32 %v93, %v97
    %vm99 = vweird.f32 %v92
    %vm100 = vweird.f32 %v93
    %vm101 = vmor %vm99, %vm100
    %v102 = vsel %vm101, %v93, %v98
    %v103 = vmul.f32 %v88, %v102
    %v104 = vld [vmem:[#allocation5] sm:$0xff]
    %v105 = vld [vmem:[#allocation5 + $0x8] sm:$0xff]
    %v106 = vld [vmem:[#allocation5 + $0x10] sm:$0xff]
    %v107 = vld [vmem:[#allocation5 + $0x18] sm:$0xff]
    %v108 = vld [vmem:[#allocation5 + $0x20] sm:$0xff]
    %v109 = vld [vmem:[#allocation5 + $0x28] sm:$0xff]
    %v110 = vld [vmem:[#allocation5 + $0x30] sm:$0xff]
    %v111 = vld [vmem:[#allocation5 + $0x38] sm:$0xff]
    %v112 = vld [vmem:[#allocation5 + $0x40] sm:$0xff]
    %v113 = vld [vmem:[#allocation5 + $0x48] sm:$0xff]
    %v114 = vld [vmem:[#allocation5 + $0x50] sm:$0xff]
    %v115 = vld [vmem:[#allocation5 + $0x58] sm:$0xff]
    %v116 = vld [vmem:[#allocation5 + $0x60] sm:$0xff]
    %v117 = vld [vmem:[#allocation5 + $0x68] sm:$0xff]
    %v118 = vld [vmem:[#allocation5 + $0x70] sm:$0xff]
    %v119 = vld [vmem:[#allocation5 + $0x78] sm:$0xff]
    %v120 = vld [vmem:[%s2] sm:$0x1]
    %v122 = vperm.slane %v120, 0
    %124 = vmatpush.msra.mxu0 %v119
    %125 = vmatpush.msra.mxu0 %v118
    %126 = vmatpush.msra.mxu0 %v117
    %127 = vmatpush.msra.mxu0 %v116
    %128 = vmatpush.msra.mxu0 %v115
    %129 = vmatpush.msra.mxu0 %v114
    %130 = vmatpush.msra.mxu0 %v113
    %131 = vmatpush.msra.mxu0 %v112
    %132 = vmatpush.msra.mxu0 %v111
    %133 = vmatpush.msra.mxu0 %v110
    %134 = vmatpush.msra.mxu0 %v109
    %135 = vmatpush.msra.mxu0 %v108
    %136 = vmatpush.msra.mxu0 %v107
    %137 = vmatpush.msra.mxu0 %v106
    %138 = vmatpush.msra.mxu0 %v105
    %139 = vmatpush.msra.mxu0 %v104
    %140 = vmatmul.f32.gmra.mxu0 %v103
    %v141 = vpop.f32.mrf.mxu0
    %v142 = vadd.f32 %v122, %v141
    %143 = vdwg.mxu0
    %v144 = vtanh.pop %v142
    %v145 = vld [vmem:[#allocation7] sm:$0xff]
    %v146 = vld [vmem:[#allocation7 + $0x8] sm:$0xff]
    %v147 = vld [vmem:[#allocation7 + $0x10] sm:$0xff]
    %v148 = vld [vmem:[#allocation7 + $0x18] sm:$0xff]
    %v149 = vld [vmem:[#allocation7 + $0x20] sm:$0xff]
    %v150 = vld [vmem:[#allocation7 + $0x28] sm:$0xff]
    %v151 = vld [vmem:[#allocation7 + $0x30] sm:$0xff]
    %v152 = vld [vmem:[#allocation7 + $0x38] sm:$0xff]
    %v153 = vld [vmem:[#allocation7 + $0x40] sm:$0xff]
    %v154 = vld [vmem:[#allocation7 + $0x48] sm:$0xff]
    %v155 = vld [vmem:[#allocation7 + $0x50] sm:$0xff]
    %v156 = vld [vmem:[#allocation7 + $0x58] sm:$0xff]
    %v157 = vld [vmem:[#allocation7 + $0x60] sm:$0xff]
    %v158 = vld [vmem:[#allocation7 + $0x68] sm:$0xff]
    %v159 = vld [vmem:[#allocation7 + $0x70] sm:$0xff]
    %v160 = vld [vmem:[#allocation7 + $0x78] sm:$0xff]
    %v161 = vld [vmem:[%s4] sm:$0x1]
    %v163 = vperm.slane %v161, 0
    %165 = vmatpush.msra.mxu0 %v160
    %166 = vmatpush.msra.mxu0 %v159
    %167 = vmatpush.msra.mxu0 %v158
    %168 = vmatpush.msra.mxu0 %v157
    %169 = vmatpush.msra.mxu0 %v156
    %170 = vmatpush.msra.mxu0 %v155
    %171 = vmatpush.msra.mxu0 %v154
    %172 = vmatpush.msra.mxu0 %v153
    %173 = vmatpush.msra.mxu0 %v152
    %174 = vmatpush.msra.mxu0 %v151
    %175 = vmatpush.msra.mxu0 %v150
    %176 = vmatpush.msra.mxu0 %v149
    %177 = vmatpush.msra.mxu0 %v148
    %178 = vmatpush.msra.mxu0 %v147
    %179 = vmatpush.msra.mxu0 %v146
    %180 = vmatpush.msra.mxu0 %v145
    %181 = vmatmul.f32.gmra.mxu0 %v144
    %v182 = vpop.f32.mrf.mxu0
    %v183 = vadd.f32 %v163, %v182
    %184 = vdwg.mxu0
    %v185 = vtanh.pop %v183
    %v186 = vld [vmem:[#allocation8] sm:$0xff]
    %v187 = vld [vmem:[#allocation8 + $0x8] sm:$0xff]
    %v188 = vld [vmem:[#allocation8 + $0x10] sm:$0xff]
    %v189 = vld [vmem:[#allocation8 + $0x18] sm:$0xff]
    %v190 = vld [vmem:[#allocation8 + $0x20] sm:$0xff]
    %v191 = vld [vmem:[#allocation8 + $0x28] sm:$0xff]
    %v192 = vld [vmem:[#allocation8 + $0x30] sm:$0xff]
    %v193 = vld [vmem:[#allocation8 + $0x38] sm:$0xff]
    %v194 = vld [vmem:[#allocation8 + $0x40] sm:$0xff]
    %v195 = vld [vmem:[#allocation8 + $0x48] sm:$0xff]
    %v196 = vld [vmem:[#allocation8 + $0x50] sm:$0xff]
    %v197 = vld [vmem:[#allocation8 + $0x58] sm:$0xff]
    %v198 = vld [vmem:[#allocation8 + $0x60] sm:$0xff]
    %v199 = vld [vmem:[#allocation8 + $0x68] sm:$0xff]
    %v200 = vld [vmem:[#allocation8 + $0x70] sm:$0xff]
    %v201 = vld [vmem:[#allocation8 + $0x78] sm:$0xff]
    %v202 = vld [vmem:[%s6] sm:$0x1]
    %v204 = vperm.slane %v202, 0
    %206 = vmatpush.msra.mxu0 %v201
    %207 = vmatpush.msra.mxu0 %v200
    %208 = vmatpush.msra.mxu0 %v199
    %209 = vmatpush.msra.mxu0 %v198
    %210 = vmatpush.msra.mxu0 %v197
    %211 = vmatpush.msra.mxu0 %v196
    %212 = vmatpush.msra.mxu0 %v195
    %213 = vmatpush.msra.mxu0 %v194
    %214 = vmatpush.msra.mxu0 %v193
    %215 = vmatpush.msra.mxu0 %v192
    %216 = vmatpush.msra.mxu0 %v191
    %217 = vmatpush.msra.mxu0 %v190
    %218 = vmatpush.msra.mxu0 %v189
    %219 = vmatpush.msra.mxu0 %v188
    %220 = vmatpush.msra.mxu0 %v187
    %221 = vmatpush.msra.mxu0 %v186
    %222 = vmatmul.f32.gmra.mxu0 %v185
    %v223 = vpop.f32.mrf.mxu0
    %v224 = vadd.f32 %v204, %v223
    %225 = vdwg.mxu0
    %226 = vmax.xlane.f32.xlu0 %v224
    %v227 = vpop.xlane.xlu0 %226
    %v228 = vsub.f32 %v224, %v227
    %v229 = vmul.f32 %v228, 1.442695
    %v230 = vpow.pop %v229
    %231 = vadd.xlane.f32.xlu0 %v230
    %v232 = vpop.xlane.xlu0 %231
    %v233 = vrcp.pop %v232
    %v234 = vmul.f32 %v232, %v233
    %v235 = vsub.f32 1.0, %v234
    %v236 = vmul.f32 %v233, %v235
    %v237 = vadd.f32 %v233, %v236
    %vm238 = vweird.f32 %v232
    %vm239 = vweird.f32 %v233
    %vm240 = vmor %vm238, %vm239
    %v241 = vsel %vm240, %v233, %v237
    %v242 = vand.u32 2147483647, %v232
    %vm243 = vcmp.eq.f32.partialorder %v242, 8.507059e+37
    %v244 = vand.u32 %v232, 2147483648
    %v245 = vor.u32 1.1754944e-38, %v244
    %v246 = vsel %vm243, %v245, %v241
    %v247 = vmul.f32 %v230, %v246
    %248 = vst [vmem:[#allocation10] sm:$0xff] %v247
    // Predicated region
    $region46: #{tpu_custom_call.1} parent=1 // pred_check
      _
    $region47: #{tpu_custom_call.1} parent=1 // pred_check_branch
      %250 = sbr.rel (0) target = $region49
    $region48: #{tpu_custom_call.1} parent=1 // pred_region
      %252 = vsyncadd [#allocation4], 0
      %s254 = sshll.u32 [#allocation10], 4
      %s255 = int_to_ptr.vmem [resolvable:$true] %s254
      %s256 = sshll.u32 %s7, 4
      %s257 = int_to_ptr.hbm [resolvable:$true] %s256
      %259 = dma.vmem_to_hbm [thread:$0]  %s255, 128, %s257, [#allocation4]
    $region49: #{tpu_custom_call.1} parent=1 // pred_fallthru
      _
    // Predicated region
    $region50: #{tpu_custom_call.1} parent=1 // pred_check
      _
    $region51: #{tpu_custom_call.1} parent=1 // pred_check_branch
      %261 = sbr.rel (0) target = $region53
    $region52: #{tpu_custom_call.1} parent=1 // pred_region
      %263 = dma.done [#allocation4], 128
    $region53: #{tpu_custom_call.1} parent=1 // pred_fallthru
      _
    %264 = vsyncpa [#allocation3], 1
    %265 = vsyncpa [#allocation6], 1
    %266 = vsyncpa [#allocation9], 1
    %267 = vsyncpa [#allocation4], 1

</llo_original>
